<compile_context>
chip_gen: v7x
topology: tpu7x:2x2x1
jax: 0.10.0
libtpu: 0.0.40
codegen_flags: <defaults>
</compile_context>

<pallas_src>
import jax
import jax.numpy as jnp
from jax.experimental import pallas as pl
from jax.experimental.pallas import tpu as pltpu


def _round_up(x, m):
    return ((x + m - 1) // m) * m


def encoder_kernel(src_ref, emb_hbm, w_ref, b_ref, bhn_ref, h_out_ref, x_scr, sem):
    """One grid step == one GRU layer. Layer 0 also gathers the embedding row."""
    gp = bhn_ref.shape[-1]                 # 128-lane gate stripe width
    layer = pl.program_id(0)

    @pl.when(layer == 0)
    def _():
        vocab = emb_hbm.shape[0]
        # Clamp untrusted token index instead of silently reading OOB VMEM/HBM.
        idx = jnp.clip(src_ref[0], 0, vocab - 1)
        cp = pltpu.make_async_copy(emb_hbm.at[pl.ds(idx, 1), :], x_scr, sem)
        cp.start()
        cp.wait()

    x = x_scr[...]                                                     # (1, GP)
    # Single MXU matmul per layer; biases pre-fused on host:
    #   stripe r: b_ir + b_hr, stripe z: b_iz + b_hz, stripe n: b_in only.
    g = jnp.dot(x, w_ref[...], preferred_element_type=jnp.float32) + b_ref[...]
    r = jax.nn.sigmoid(g[:, 0 * gp:1 * gp])
    z = jax.nn.sigmoid(g[:, 1 * gp:2 * gp])
    # torch: n = tanh(i_n + b_in + r * (W_hn h + b_hn)); with h0=0 -> r * b_hn.
    n = jnp.tanh(g[:, 2 * gp:3 * gp] + r * bhn_ref[...])
    h = (1.0 - z) * n                                                  # + z*h0 == 0
    x_scr[...] = h                       # feeds the next layer
    h_out_ref[...] = h                   # per-layer final hidden state


def encoder_forward(params, src, hidden_dim, num_layers):
    gp = params["gate_pad"]
    L = num_layers
    hidden_pad = pl.pallas_call(
        encoder_kernel,
        out_shape=jax.ShapeDtypeStruct((L, 1, gp), jnp.float32),
        grid_spec=pltpu.PrefetchScalarGridSpec(
            num_scalar_prefetch=1,                       # src token index -> SMEM
            grid=(L,),
            in_specs=[
                pl.BlockSpec(memory_space=pl.ANY),                            # embedding table stays in HBM
                pl.BlockSpec((None, gp, 3 * gp), lambda l, src: (l, 0, 0)),   # per-layer W_ih (double-buffered)
                pl.BlockSpec((None, 1, 3 * gp), lambda l, src: (l, 0, 0)),    # fused input/hidden biases
                pl.BlockSpec((None, 1, gp), lambda l, src: (l, 0, 0)),        # b_hn (stays inside r* term)
            ],
            out_specs=pl.BlockSpec((None, 1, gp), lambda l, src: (l, 0, 0)),
            scratch_shapes=[
                pltpu.VMEM((1, gp), jnp.float32),        # running activation, persists across layers
                pltpu.SemaphoreType.DMA,                 # embedding row gather
            ],
        ),
        compiler_params=pltpu.CompilerParams(
            dimension_semantics=("arbitrary",)),         # layer chain is serial
    )(src, params["emb_pad"], params["w_stack"], params["b_stack"], params["bhn_stack"])

    hidden = hidden_pad[:, :, :hidden_dim]               # (num_layers, 1, H)
    outputs = hidden[-1:]                                # (1, 1, H): top-layer output, seq_len=1
    return outputs, hidden


def init_params(key, input_dim, hidden_dim, embbed_dim, num_layers):
    """Synthetic params mirroring nn.Embedding + nn.GRU, pre-packed for the kernel."""
    gp = _round_up(max(embbed_dim, hidden_dim), 128)     # 128-lane stripe per gate
    H = hidden_dim
    bound = 1.0 / float(H) ** 0.5
    keys = jax.random.split(key, 1 + 3 * num_layers)

    emb = jax.random.normal(keys[0], (input_dim, embbed_dim), jnp.float32)
    emb_pad = jnp.zeros((input_dim, gp), jnp.float32).at[:, :embbed_dim].set(emb)

    raw_layers, w_layers, b_layers, bhn_layers = [], [], [], []
    for l in range(num_layers):
        in_dim = embbed_dim if l == 0 else H
        kw, kbi, kbh = keys[1 + 3 * l: 4 + 3 * l]
        # torch gate order (r, z, n). weight_hh is never used for seq_len=1 with
        # h0=0 (W_hh @ 0 == 0), so it is not materialized; only b_hh survives.
        wih = jax.random.uniform(kw, (3 * H, in_dim), jnp.float32, -bound, bound)
        bih = jax.random.uniform(kbi, (3 * H,), jnp.float32, -bound, bound)
        bhh = jax.random.uniform(kbh, (3 * H,), jnp.float32, -bound, bound)
        raw_layers.append(dict(wih=wih, bih=bih, bhh=bhh))

        wih_t = wih.T                                    # (in_dim, 3H), columns r|z|n
        w_pad = jnp.zeros((gp, 3 * gp), jnp.float32)
        for g in range(3):
            w_pad = w_pad.at[:in_dim, g * gp:g * gp + H].set(
                wih_t[:, g * H:(g + 1) * H])
        b_pad = jnp.zeros((1, 3 * gp), jnp.float32)
        b_pad = b_pad.at[0, 0 * gp:0 * gp + H].set(bih[0:H] + bhh[0:H])          # r
        b_pad = b_pad.at[0, 1 * gp:1 * gp + H].set(bih[H:2 * H] + bhh[H:2 * H])  # z
        b_pad = b_pad.at[0, 2 * gp:2 * gp + H].set(bih[2 * H:3 * H])             # n (i-part only)
        bhn_pad = jnp.zeros((1, gp), jnp.float32).at[0, :H].set(bhh[2 * H:3 * H])

        w_layers.append(w_pad)
        b_layers.append(b_pad)
        bhn_layers.append(bhn_pad)

    return {
        "gate_pad": gp,
        "emb_pad": emb_pad,                              # (vocab, GP), left in HBM
        "w_stack": jnp.stack(w_layers),                  # (L, GP, 3*GP)
        "b_stack": jnp.stack(b_layers),                  # (L, 1, 3*GP)
        "bhn_stack": jnp.stack(bhn_layers),              # (L, 1, GP)
        "raw": {"emb": emb, "layers": raw_layers},       # for the pure-JAX reference
    }


def reference_forward(params, src, hidden_dim, num_layers):
    """Plain-JAX torch.nn.GRU semantics (seq_len=1, batch=1, h0=0) for validation."""
    raw = params["raw"]
    H = hidden_dim
    x = raw["emb"][src[0]].reshape(1, -1)
    hs = []
    for l in range(num_layers):
        lp = raw["layers"][l]
        gi = x @ lp["wih"].T + lp["bih"][None, :]
        gh = lp["bhh"][None, :]                          # W_hh @ h0 == 0
        r = jax.nn.sigmoid(gi[:, :H] + gh[:, :H])
        z = jax.nn.sigmoid(gi[:, H:2 * H] + gh[:, H:2 * H])
        n = jnp.tanh(gi[:, 2 * H:] + r * gh[:, 2 * H:])
        h = (1.0 - z) * n
        hs.append(h)
        x = h
    return x.reshape(1, 1, H), jnp.stack(hs, axis=0)


if __name__ == "__main__":
    input_dim, hidden_dim, embbed_dim, num_layers = 16, 32, 32, 2
    params = init_params(jax.random.PRNGKey(0), input_dim, hidden_dim, embbed_dim, num_layers)

    # src: a single token index (as implied by .view(1, 1, -1) in the forward)
    src = jnp.array([3], dtype=jnp.int32)

    outputs, hidden = encoder_forward(params, src, hidden_dim, num_layers)
    jax.block_until_ready((outputs, hidden))

    assert outputs.shape == (1, 1, hidden_dim)
    assert hidden.shape == (num_layers, 1, hidden_dim)
    assert outputs.dtype == jnp.float32 and hidden.dtype == jnp.float32

    ref_out, ref_hid = reference_forward(params, src, hidden_dim, num_layers)
    assert bool(jnp.allclose(outputs, ref_out, atol=2e-2, rtol=2e-2))
    assert bool(jnp.allclose(hidden, ref_hid, atol=2e-2, rtol=2e-2))

    print("KERNEL_OK")
</pallas_src>

<mosaic_0001>
module attributes {stable_mosaic.version = 11 : i64} {
  func.func @encoder_kernel(%arg0: i32, %arg1: memref<1xi32, #tpu.memory_space<smem>>, %arg2: memref<16x128xf32, #tpu.memory_space<any>>, %arg3: memref<1x128x384xf32, #tpu.memory_space<vmem>>, %arg4: memref<1x1x384xf32, #tpu.memory_space<vmem>>, %arg5: memref<1x1x128xf32, #tpu.memory_space<vmem>>, %arg6: memref<1x1x128xf32, #tpu.memory_space<vmem>>, %arg7: memref<1x128xf32, #tpu.memory_space<vmem>>, %arg8: memref<!tpu.dma_semaphore, #tpu.memory_space<semaphore_mem>>) attributes {dimension_semantics = [#tpu.dimension_semantics<arbitrary>], iteration_bounds = array<i64: 2>, scalar_prefetch = 1 : i64, scratch_operands = 2 : i64, tpu.core_type = #tpu.core_type<tc>, window_params = [{}, {transform_indices = @transform_1, window_bounds = array<i64: 1, 128, 384>}, {transform_indices = @transform_2, window_bounds = array<i64: 1, 1, 384>}, {transform_indices = @transform_3, window_bounds = array<i64: 1, 1, 128>}, {transform_indices = @transform_4, window_bounds = array<i64: 1, 1, 128>}]} {
    %c0_i32 = arith.constant 0 : i32
    %0 = arith.cmpi eq, %arg0, %c0_i32 : i32
    %1 = arith.extui %0 : i1 to i32
    %c0_i32_0 = arith.constant 0 : i32
    %2 = arith.cmpi ne, %1, %c0_i32_0 : i32
    scf.if %2 {
      %c0_19 = arith.constant 0 : index
      %35 = memref.load %arg1[%c0_19] : memref<1xi32, #tpu.memory_space<smem>>
      %c0_i32_20 = arith.constant 0 : i32
      %c15_i32 = arith.constant 15 : i32
      %36 = arith.maxsi %c0_i32_20, %35 : i32
      %37 = arith.minsi %c15_i32, %36 : i32
      %c0_i32_21 = arith.constant 0 : i32
      %38 = tpu.memref_slice %arg2[%37, %c0_i32_21] : memref<16x128xf32, #tpu.memory_space<any>> -> memref<1x128xf32, #tpu.memory_space<any>>
      tpu.enqueue_dma source(%38 : memref<1x128xf32, #tpu.memory_space<any>>) target(%arg7 : memref<1x128xf32, #tpu.memory_space<vmem>>) target_semaphore(%arg8 : memref<!tpu.dma_semaphore, #tpu.memory_space<semaphore_mem>>)
      %c0_i32_22 = arith.constant 0 : i32
      %39 = tpu.memref_slice %arg2[%37, %c0_i32_22] : memref<16x128xf32, #tpu.memory_space<any>> -> memref<1x128xf32, #tpu.memory_space<any>>
      tpu.wait_dma2 semaphore(%arg8 : memref<!tpu.dma_semaphore, #tpu.memory_space<semaphore_mem>>) src(%39 : memref<1x128xf32, #tpu.memory_space<any>>) dst(%arg7 : memref<1x128xf32, #tpu.memory_space<vmem>>)
    } else {
    }
    %c0 = arith.constant 0 : index
    %c0_1 = arith.constant 0 : index
    %3 = vector.load %arg7[%c0, %c0_1] : memref<1x128xf32, #tpu.memory_space<vmem>>, vector<1x128xf32>
    %c0_2 = arith.constant 0 : index
    %c0_3 = arith.constant 0 : index
    %c0_4 = arith.constant 0 : index
    %4 = vector.load %arg3[%c0_2, %c0_3, %c0_4] : memref<1x128x384xf32, #tpu.memory_space<vmem>>, vector<1x128x384xf32>
    %5 = vector.shape_cast %4 : vector<1x128x384xf32> to vector<128x384xf32>
    %cst = arith.constant dense<0.000000e+00> : vector<1x384xf32>
    %6 = tpu.matmul %3, %5, %cst {dimension_numbers = #tpu.dot_dimension_numbers<[1], [0], [0], [1], [0, 0, 1, 1], [], []>} : vector<1x128xf32>, vector<128x384xf32>, vector<1x384xf32> -> vector<1x384xf32>
    %c0_5 = arith.constant 0 : index
    %c0_6 = arith.constant 0 : index
    %c0_7 = arith.constant 0 : index
    %7 = vector.load %arg4[%c0_5, %c0_6, %c0_7] : memref<1x1x384xf32, #tpu.memory_space<vmem>>, vector<1x1x384xf32>
    %8 = vector.shape_cast %7 : vector<1x1x384xf32> to vector<1x384xf32>
    %9 = arith.addf %6, %8 : vector<1x384xf32>
    %10 = vector.extract_strided_slice %9 {offsets = [0, 0], sizes = [1, 128], strides = [1, 1]} : vector<1x384xf32> to vector<1x128xf32>
    %11 = arith.negf %10 : vector<1x128xf32>
    %12 = math.exp %11 : vector<1x128xf32>
    %cst_8 = arith.constant 1.000000e+00 : f32
    %13 = vector.broadcast %cst_8 : f32 to vector<1x128xf32>
    %14 = arith.addf %13, %12 : vector<1x128xf32>
    %15 = arith.divf %13, %14 : vector<1x128xf32>
    %16 = vector.extract_strided_slice %9 {offsets = [0, 128], sizes = [1, 128], strides = [1, 1]} : vector<1x384xf32> to vector<1x128xf32>
    %17 = arith.negf %16 : vector<1x128xf32>
    %18 = math.exp %17 : vector<1x128xf32>
    %cst_9 = arith.constant 1.000000e+00 : f32
    %19 = vector.broadcast %cst_9 : f32 to vector<1x128xf32>
    %20 = arith.addf %19, %18 : vector<1x128xf32>
    %21 = arith.divf %19, %20 : vector<1x128xf32>
    %22 = vector.extract_strided_slice %9 {offsets = [0, 256], sizes = [1, 128], strides = [1, 1]} : vector<1x384xf32> to vector<1x128xf32>
    %c0_10 = arith.constant 0 : index
    %c0_11 = arith.constant 0 : index
    %c0_12 = arith.constant 0 : index
    %23 = vector.load %arg5[%c0_10, %c0_11, %c0_12] : memref<1x1x128xf32, #tpu.memory_space<vmem>>, vector<1x1x128xf32>
    %24 = vector.shape_cast %23 : vector<1x1x128xf32> to vector<1x128xf32>
    %25 = arith.mulf %15, %24 : vector<1x128xf32>
    %26 = arith.addf %22, %25 : vector<1x128xf32>
    %27 = math.tanh %26 : vector<1x128xf32>
    %cst_13 = arith.constant 1.000000e+00 : f32
    %28 = vector.broadcast %cst_13 : f32 to vector<1x128xf32>
    %29 = arith.subf %28, %21 : vector<1x128xf32>
    %30 = arith.mulf %29, %27 : vector<1x128xf32>
    %c0_14 = arith.constant 0 : index
    %c0_15 = arith.constant 0 : index
    %31 = vector.load %arg7[%c0_14, %c0_15] : memref<1x128xf32, #tpu.memory_space<vmem>>, vector<1x128xf32>
    tpu.vector_store %arg7[%c0_14, %c0_15], %30 {strides = array<i32>} : memref<1x128xf32, #tpu.memory_space<vmem>>, vector<1x128xf32>,
    %c0_16 = arith.constant 0 : index
    %c0_17 = arith.constant 0 : index
    %c0_18 = arith.constant 0 : index
    %32 = vector.load %arg6[%c0_16, %c0_17, %c0_18] : memref<1x1x128xf32, #tpu.memory_space<vmem>>, vector<1x1x128xf32>
    %33 = vector.shape_cast %32 : vector<1x1x128xf32> to vector<1x128xf32>
    %34 = vector.shape_cast %30 : vector<1x128xf32> to vector<1x1x128xf32>
    tpu.vector_store %arg6[%c0_16, %c0_17, %c0_18], %34 {strides = array<i32>} : memref<1x1x128xf32, #tpu.memory_space<vmem>>, vector<1x1x128xf32>,
    return
  }
  func.func @transform_1(%arg0: i32, %arg1: memref<1xi32, #tpu.memory_space<smem>>) -> (i32, i32, i32) {
    %c0_i32 = arith.constant 0 : i32
    %c0_i32_0 = arith.constant 0 : i32
    %c0_i32_1 = arith.constant 0 : i32
    return %arg0, %c0_i32, %c0_i32_0 : i32, i32, i32
  }
  func.func @transform_2(%arg0: i32, %arg1: memref<1xi32, #tpu.memory_space<smem>>) -> (i32, i32, i32) {
    %c0_i32 = arith.constant 0 : i32
    %c0_i32_0 = arith.constant 0 : i32
    %c0_i32_1 = arith.constant 0 : i32
    return %arg0, %c0_i32, %c0_i32_0 : i32, i32, i32
  }
  func.func @transform_3(%arg0: i32, %arg1: memref<1xi32, #tpu.memory_space<smem>>) -> (i32, i32, i32) {
    %c0_i32 = arith.constant 0 : i32
    %c0_i32_0 = arith.constant 0 : i32
    %c0_i32_1 = arith.constant 0 : i32
    return %arg0, %c0_i32, %c0_i32_0 : i32, i32, i32
  }
  func.func @transform_4(%arg0: i32, %arg1: memref<1xi32, #tpu.memory_space<smem>>) -> (i32, i32, i32) {
    %c0_i32 = arith.constant 0 : i32
    %c0_i32_0 = arith.constant 0 : i32
    %c0_i32_1 = arith.constant 0 : i32
    return %arg0, %c0_i32, %c0_i32_0 : i32, i32, i32
  }
}

</mosaic_0001>

<llo_original>
// kernel: tpu_custom_call.1
$region0: #{tpu_custom_call.1}
  #allocation0 [shape = 'u32[]', space=smem, size = 0x4, offset = 0x4, fixed_abs, tag = 'smem constant byte address 0x4 - core index']
  #allocation1 [shape = 'u32[144,128]{1,0:T(1,128)}', space=vmem, size = 0x12000, scoped, tag = 'internal scratch']
  #allocation2 [shape = 'f32[1,128]{1,0:T(1,128)}', space=vmem, size = 0x200, scoped, tag = 'scratch operand']
  #allocation3 [shape = 's32[1]{0}', space=sflag, size = 0x4, scoped, tag = 'scratch operand']
  #allocation4 [shape = 's32[1]{0}', space=sflag, size = 0x4, scoped, tag = 'scoped memory for tpu_custom_call.1']
  #allocation5 [shape = 's32[1]{0:T(128)S(6)}', space=smem, size = 0x200, scoped, tag = 'prefetched SMEM operand 0']
  #allocation10 [shape = 's32[]', space=sflag, size = 0x4, offset = 0, fixed_abs, tag = 'sflag constant byte address 0x0 - dummy sync flag']
  #allocation11 [shape = 's32[]', space=sflag, size = 0x4, offset = 0, fixed_abs, tag = 'sflag constant byte address 0x0 - dummy sync flag']
  #allocation12 [shape = 'u32[]', space=smem, size = 0x4, offset = 0x44, fixed_abs, tag = 'smem constant byte address 0x44 - assertion arg 0']
  #allocation13 [shape = 'u32[]', space=smem, size = 0x4, offset = 0x48, fixed_abs, tag = 'smem constant byte address 0x48 - assertion arg 1']
  %s0 = inlined_call_operand.<no memory space> [shape: s32[1], index: 0, kind: input, shape index: {}]
  %s1 = inlined_call_operand.hbm [shape: f32[16,128], index: 1, kind: input, shape index: {}]
  %s2 = inlined_call_operand.hbm [shape: f32[2,128,384], index: 2, kind: input, shape index: {}]
  %s3 = inlined_call_operand.vmem [shape: f32[2,1,384], index: 3, kind: input, shape index: {}]
  %s4 = inlined_call_operand.vmem [shape: f32[2,1,128], index: 4, kind: input, shape index: {}]
  %s5 = inlined_call_operand.hbm [shape: f32[2,1,128], index: 5, kind: output, shape index: {}]
  %s6 = sld [smem:[#allocation0]]
  $region57: #{tpu_custom_call.1} parent=0
    _
  %s8 = ssub.s32 1, %s6
  %s9 = scalar_select 0, %s8, %s6
  %10 = sst [smem:[#allocation5]] %s0
  $region1: #{tpu_custom_call.1} parent=0
    #allocation6 [shape = 'u8[393216]{0}', space=vmem, size = 0x60000, scoped, tag = 'input window, operand 2']
    #allocation7 [shape = 's32[2]{0}', space=sflag, size = 0x8, scoped, tag = 'scoped memory for tpu_custom_call.1']
    #allocation8 [shape = 's32[2]{0}', space=sflag, size = 0x8, scoped, tag = 'scoped memory for tpu_custom_call.1']
    #allocation9 [shape = 'u8[1024]{0}', space=vmem, size = 0x400, scoped, tag = 'output window, operand 0']
    %11 = vsyncpa [#allocation7], 0
    %s12 = scalar_lea.sflag [#allocation7], 1
    %13 = vsyncpa %s12, 0
    %14 = vsyncpa [#allocation8], 0
    %s15 = scalar_lea.sflag [#allocation8], 1
    %16 = vsyncpa %s15, 0
    loop: start=0, step=1, limit=4
    $region2: #{tpu_custom_call.1} parent=1 // loop_pre_header
      _
    $region3: #{tpu_custom_call.1} parent=1 // loop_header
      %s18 = sphi 0, %s22
      %p19 = scmp.ge.s32.totalorder %s18, 4
      %s28 = sphi 0, %s30
      %s31 = sphi 0, %s28
      %s32 = sphi 0, %s31
      %s48 = sphi 0, %s32
      %s54 = sphi 0, %s56
      %s57 = sphi 0, %s54
      %s58 = sphi 0, %s57
      %s74 = sphi 0, %s58
      %s80 = sphi 0, %s82
      %s83 = sphi 0, %s80
      %s84 = sphi 0, %s83
      %s100 = sphi 0, %s84
      %s106 = sphi 0, %s108
      %s109 = sphi 0, %s106
      %s110 = sphi 0, %s109
      %s126 = sphi 0, %s110
    $region4: #{tpu_custom_call.1} parent=1 // loop_header_branch
      %21 = sbr.rel (%p19) target = $region8
    $region5: #{tpu_custom_call.1} parent=1 // loop_body
      %s23 = ssub.s32 %s18, 1
      %s24 = ssub.s32 %s18, 2
      %s25 = sadd.s32 %s18, 1
      %s26 = ssub.s32 %s18, %s25
      %p27 = scmp.eq.s32.totalorder %s26, 0
      %s29 = sadd.s32 %s28, 1
      %s30 = scalar_select %p27, %s28, %s29
      %p33 = pneg %p27
      %p34 = scmp.eq.s32.totalorder %s18, 1
      %p35 = por %p33, %p34
      %p36 = scmp.ne.s32.totalorder %s28, %s31
      %p37 = scmp.eq.s32.totalorder %s18, 0
      %p38 = por %p36, %p37
      %p39 = scmp.ne.s32.totalorder %s28, %s31
      %p40 = scmp.eq.s32.totalorder %s23, 1
      %p41 = por %p39, %p40
      %p42 = scmp.ne.s32.totalorder %s31, %s32
      %p43 = scmp.eq.s32.totalorder %s23, 0
      %p44 = por %p42, %p43
      %p45 = scmp.ne.s32.totalorder %s31, %s32
      %p46 = scmp.eq.s32.totalorder %s24, 1
      %p47 = por %p45, %p46
      %p49 = scmp.ne.s32.totalorder %s32, %s48
      %p50 = scmp.eq.s32.totalorder %s24, 0
      %p51 = por %p49, %p50
      %s52 = ssub.s32 %s18, %s25
      %p53 = scmp.eq.s32.totalorder %s52, 0
      %s55 = sadd.s32 %s54, 1
      %s56 = scalar_select %p53, %s54, %s55
      %p59 = pneg %p53
      %p60 = scmp.eq.s32.totalorder %s18, 1
      %p61 = por %p59, %p60
      %p62 = scmp.ne.s32.totalorder %s54, %s57
      %p63 = scmp.eq.s32.totalorder %s18, 0
      %p64 = por %p62, %p63
      %p65 = scmp.ne.s32.totalorder %s54, %s57
      %p66 = scmp.eq.s32.totalorder %s23, 1
      %p67 = por %p65, %p66
      %p68 = scmp.ne.s32.totalorder %s57, %s58
      %p69 = scmp.eq.s32.totalorder %s23, 0
      %p70 = por %p68, %p69
      %p71 = scmp.ne.s32.totalorder %s57, %s58
      %p72 = scmp.eq.s32.totalorder %s24, 1
      %p73 = por %p71, %p72
      %p75 = scmp.ne.s32.totalorder %s58, %s74
      %p76 = scmp.eq.s32.totalorder %s24, 0
      %p77 = por %p75, %p76
      %s78 = ssub.s32 %s18, %s25
      %p79 = scmp.eq.s32.totalorder %s78, 0
      %s81 = sadd.s32 %s80, 1
      %s82 = scalar_select %p79, %s80, %s81
      %p85 = pneg %p79
      %p86 = scmp.eq.s32.totalorder %s18, 1
      %p87 = por %p85, %p86
      %p88 = scmp.ne.s32.totalorder %s80, %s83
      %p89 = scmp.eq.s32.totalorder %s18, 0
      %p90 = por %p88, %p89
      %p91 = scmp.ne.s32.totalorder %s80, %s83
      %p92 = scmp.eq.s32.totalorder %s23, 1
      %p93 = por %p91, %p92
      %p94 = scmp.ne.s32.totalorder %s83, %s84
      %p95 = scmp.eq.s32.totalorder %s23, 0
      %p96 = por %p94, %p95
      %p97 = scmp.ne.s32.totalorder %s83, %s84
      %p98 = scmp.eq.s32.totalorder %s24, 1
      %p99 = por %p97, %p98
      %p101 = scmp.ne.s32.totalorder %s84, %s100
      %p102 = scmp.eq.s32.totalorder %s24, 0
      %p103 = por %p101, %p102
      %s104 = ssub.s32 %s18, %s25
      %p105 = scmp.eq.s32.totalorder %s104, 0
      %s107 = sadd.s32 %s106, 1
      %s108 = scalar_select %p105, %s106, %s107
      %p111 = pneg %p105
      %p112 = scmp.eq.s32.totalorder %s18, 1
      %p113 = por %p111, %p112
      %p114 = scmp.ne.s32.totalorder %s106, %s109
      %p115 = scmp.eq.s32.totalorder %s18, 0
      %p116 = por %p114, %p115
      %p117 = scmp.ne.s32.totalorder %s106, %s109
      %p118 = scmp.eq.s32.totalorder %s23, 1
      %p119 = por %p117, %p118
      %p120 = scmp.ne.s32.totalorder %s109, %s110
      %p121 = scmp.eq.s32.totalorder %s23, 0
      %p122 = por %p120, %p121
      %p123 = scmp.ne.s32.totalorder %s109, %s110
      %p124 = scmp.eq.s32.totalorder %s24, 1
      %p125 = por %p123, %p124
      %p127 = scmp.ne.s32.totalorder %s110, %s126
      %p128 = scmp.eq.s32.totalorder %s24, 0
      %p129 = por %p127, %p128
      %p130 = scmp.le.s32.totalorder 1, %s18
      %p131 = scmp.lt.s32.totalorder %s18, 3
      %p132 = pnand %p130, %p131
      %p133 = pneg %p132
      // Predicated region
      $region9: #{tpu_custom_call.1} parent=5 // pred_check
        _
      $region10: #{tpu_custom_call.1} parent=5 // pred_check_branch
        %135 = sbr.rel (%p132) target = $region12
      $region11: #{tpu_custom_call.1} parent=5 // pred_region
        %s136 = ssub.s32 %s18, 1
      $region12: #{tpu_custom_call.1} parent=5 // pred_fallthru
        _
      %p137 = scmp.lt.s32.totalorder %s18, 2
      // Predicated region
      $region13: #{tpu_custom_call.1} parent=5 // pred_check
        %p138 = pneg %p137
      $region14: #{tpu_custom_call.1} parent=5 // pred_check_branch
        %140 = sbr.rel (%p138) target = $region16
      $region15: #{tpu_custom_call.1} parent=5 // pred_region
        // Predicated region
        $region17: #{tpu_custom_call.1} parent=15 // pred_check
          %p141 = pneg %p38
        $region18: #{tpu_custom_call.1} parent=15 // pred_check_branch
          %143 = sbr.rel (%p141) target = $region20
        $region19: #{tpu_custom_call.1} parent=15 // pred_region
          %s144 = sand.u32 %s28, 1
          %s145 = scalar_lea.sflag [#allocation7], %s144
          %s146 = sand.u32 %s28, 1
          %s147 = smul.addr %s146, 384
          %s148 = scalar_lea.vmem [#allocation6], %s147
          %s150 = ssub.s32 6144, 6144
          %151 = vsyncadd %s145, %s150
          %s152 = smul.addr %s18, 48
          %s153 = smul.addr %s152, 128
          %s154 = scalar_lea.hbm %s2, %s153
          %s155 = sshll.u32 %s148, 4
          %s156 = int_to_ptr.vmem [resolvable:$true] %s155
          %161 = dma.hbm_to_vmem [thread:$0]  %s154, 6144, %s156, %s145, 384, 384, 24
        $region20: #{tpu_custom_call.1} parent=15 // pred_fallthru
          _
        // Predicated region
        $region21: #{tpu_custom_call.1} parent=15 // pred_check
          %p162 = pneg %p64
        $region22: #{tpu_custom_call.1} parent=15 // pred_check_branch
          %164 = sbr.rel (%p162) target = $region24
        $region23: #{tpu_custom_call.1} parent=15 // pred_region
          %p165 = scmp.lt.s32.totalorder %s18, 1
          %s166 = scalar_select %p165, %s18, 1
          %s167 = smul.addr %s166, 3
          %s168 = scalar_lea.vmem %s3, %s167
        $region24: #{tpu_custom_call.1} parent=15 // pred_fallthru
          _
        // Predicated region
        $region25: #{tpu_custom_call.1} parent=15 // pred_check
          %p169 = pneg %p90
        $region26: #{tpu_custom_call.1} parent=15 // pred_check_branch
          %171 = sbr.rel (%p169) target = $region28
        $region27: #{tpu_custom_call.1} parent=15 // pred_region
          %p172 = scmp.lt.s32.totalorder %s18, 1
          %s173 = scalar_select %p172, %s18, 1
          %s174 = scalar_lea.vmem %s4, %s173
        $region28: #{tpu_custom_call.1} parent=15 // pred_fallthru
          _
      $region16: #{tpu_custom_call.1} parent=5 // pred_fallthru
        _
      %p175 = scmp.le.s32.totalorder 1, %s18
      %p176 = scmp.lt.s32.totalorder %s18, 3
      %p177 = pnand %p175, %p176
      %p178 = pneg %p177
      // Predicated region
      $region29: #{tpu_custom_call.1} parent=5 // pred_check
        _
      $region30: #{tpu_custom_call.1} parent=5 // pred_check_branch
        %180 = sbr.rel (%p177) target = $region32
      $region31: #{tpu_custom_call.1} parent=5 // pred_region
        %s181 = ssub.s32 %s18, 1
        %s182 = sand.u32 %s31, 1
        %s183 = scalar_lea.sflag [#allocation7], %s182
        %s184 = sand.u32 %s31, 1
        %s185 = smul.addr %s184, 384
        %s186 = scalar_lea.vmem [#allocation6], %s185
        // Predicated region
        $region33: #{tpu_custom_call.1} parent=31 // pred_check
          %p187 = pneg %p44
        $region34: #{tpu_custom_call.1} parent=31 // pred_check_branch
          %189 = sbr.rel (%p187) target = $region36
        $region35: #{tpu_custom_call.1} parent=31 // pred_region
          %190 = dma.done %s183, 6144
        $region36: #{tpu_custom_call.1} parent=31 // pred_fallthru
          _
        %s191 = sand.u32 %s31, 1
        %s192 = scalar_lea.sflag [#allocation7], %s191
        %s193 = sand.u32 %s31, 1
        %s194 = smul.addr %s193, 384
        %s195 = scalar_lea.vmem [#allocation6], %s194
        %p196 = pneg %p44
        %p197 = pneg %p41
        %p198 = scmp.lt.s32.totalorder %s23, 1
        %s199 = scalar_select %p198, %s23, 1
        %s200 = smul.addr %s199, 3
        %s201 = scalar_lea.vmem %s3, %s200
        %p202 = pneg %p70
        %p203 = pneg %p67
        %p204 = scmp.lt.s32.totalorder %s23, 1
        %s205 = scalar_select %p204, %s23, 1
        %s206 = scalar_lea.vmem %s4, %s205
        %p207 = pneg %p96
        %p208 = pneg %p93
        %p209 = pneg %p122
        %p210 = pneg %p119
        %s211 = sand.u32 %s109, 1
        %s212 = scalar_lea.sflag [#allocation8], %s211
        %s213 = sand.u32 %s109, 1
        %s214 = scalar_lea.vmem [#allocation9], %s213
        %p215 = scmp.lt.s32.totalorder %s23, 1
        %s216 = scalar_select %p215, %s23, 1
        %s217 = smul.addr %s216, 3
        %s218 = scalar_lea.vmem %s3, %s217
        %p219 = scmp.lt.s32.totalorder %s23, 1
        %s220 = scalar_select %p219, %s23, 1
        %s221 = scalar_lea.vmem %s4, %s220
        %p222 = scmp.eq.s32.totalorder %s23, 0
        // Predicated region
        $region37: #{tpu_custom_call.1} parent=31 // pred_check
          %p223 = pneg %p222
        $region38: #{tpu_custom_call.1} parent=31 // pred_check_branch
          %225 = sbr.rel (%p223) target = $region40
        $region39: #{tpu_custom_call.1} parent=31 // pred_region
          %s226 = sld [smem:[#allocation5]]
          %p227 = scmp.gt.s32.totalorder %s226, 0
          %s228 = scalar_select %p227, %s226, 0
          %p229 = scmp.lt.s32.totalorder %s228, 15
          %s230 = scalar_select %p229, %s228, 15
          %s231 = smul.addr %s230, 16
          %s232 = scalar_lea.hbm %s1, %s231
          // Predicated region
          $region41: #{tpu_custom_call.1} parent=39 // pred_check
            _
          $region42: #{tpu_custom_call.1} parent=39 // pred_check_branch
            %234 = sbr.rel target = $region44
          $region43: #{tpu_custom_call.1} parent=39 // pred_region
            %235 = sst [smem:[#allocation12]] [#allocation11]
            %236 = sst [smem:[#allocation13]] [#allocation10]
          $region44: #{tpu_custom_call.1} parent=39 // pred_fallthru
            _
          %238 = shalt.err (0)
          %s240 = sshll.u32 [#allocation2], 4
          %s241 = int_to_ptr.vmem [resolvable:$true] %s240
          %243 = dma.hbm_to_vmem [thread:$0]  %s232, 16, %s241, [#allocation3]
          %s244 = smul.u32 1, 1
          %s245 = sshll.u32 %s244, 4
          %246 = dma.done [#allocation3], %s245
        $region40: #{tpu_custom_call.1} parent=31 // pred_fallthru
          _
        %v247 = vld [vmem:[#allocation2] sm:$0x1]
        %v248 = vld [vmem:[%s186] sm:$0xff]
        %v249 = vld [vmem:[%s186 + $0x8] sm:$0xff]
        %v250 = vld [vmem:[%s186 + $0x10] sm:$0xff]
        %v251 = vld [vmem:[%s186 + $0x18] sm:$0xff]
        %v252 = vld [vmem:[%s186 + $0x20] sm:$0xff]
        %v253 = vld [vmem:[%s186 + $0x28] sm:$0xff]
        %v254 = vld [vmem:[%s186 + $0x30] sm:$0xff]
        %v255 = vld [vmem:[%s186 + $0x38] sm:$0xff]
        %v256 = vld [vmem:[%s186 + $0x40] sm:$0xff]
        %v257 = vld [vmem:[%s186 + $0x48] sm:$0xff]
        %v258 = vld [vmem:[%s186 + $0x50] sm:$0xff]
        %v259 = vld [vmem:[%s186 + $0x58] sm:$0xff]
        %v260 = vld [vmem:[%s186 + $0x60] sm:$0xff]
        %v261 = vld [vmem:[%s186 + $0x68] sm:$0xff]
        %v262 = vld [vmem:[%s186 + $0x70] sm:$0xff]
        %v263 = vld [vmem:[%s186 + $0x78] sm:$0xff]
        %v264 = vld [vmem:[%s186 + $0x80] sm:$0xff]
        %v265 = vld [vmem:[%s186 + $0x88] sm:$0xff]
        %v266 = vld [vmem:[%s186 + $0x90] sm:$0xff]
        %v267 = vld [vmem:[%s186 + $0x98] sm:$0xff]
        %v268 = vld [vmem:[%s186 + $0xa0] sm:$0xff]
        %v269 = vld [vmem:[%s186 + $0xa8] sm:$0xff]
        %v270 = vld [vmem:[%s186 + $0xb0] sm:$0xff]
        %v271 = vld [vmem:[%s186 + $0xb8] sm:$0xff]
        %v272 = vld [vmem:[%s186 + $0xc0] sm:$0xff]
        %v273 = vld [vmem:[%s186 + $0xc8] sm:$0xff]
        %v274 = vld [vmem:[%s186 + $0xd0] sm:$0xff]
        %v275 = vld [vmem:[%s186 + $0xd8] sm:$0xff]
        %v276 = vld [vmem:[%s186 + $0xe0] sm:$0xff]
        %v277 = vld [vmem:[%s186 + $0xe8] sm:$0xff]
        %v278 = vld [vmem:[%s186 + $0xf0] sm:$0xff]
        %v279 = vld [vmem:[%s186 + $0xf8] sm:$0xff]
        %v280 = vld [vmem:[%s186 + $0x100] sm:$0xff]
        %v281 = vld [vmem:[%s186 + $0x108] sm:$0xff]
        %v282 = vld [vmem:[%s186 + $0x110] sm:$0xff]
        %v283 = vld [vmem:[%s186 + $0x118] sm:$0xff]
        %v284 = vld [vmem:[%s186 + $0x120] sm:$0xff]
        %v285 = vld [vmem:[%s186 + $0x128] sm:$0xff]
        %v286 = vld [vmem:[%s186 + $0x130] sm:$0xff]
        %v287 = vld [vmem:[%s186 + $0x138] sm:$0xff]
        %v288 = vld [vmem:[%s186 + $0x140] sm:$0xff]
        %v289 = vld [vmem:[%s186 + $0x148] sm:$0xff]
        %v290 = vld [vmem:[%s186 + $0x150] sm:$0xff]
        %v291 = vld [vmem:[%s186 + $0x158] sm:$0xff]
        %v292 = vld [vmem:[%s186 + $0x160] sm:$0xff]
        %v293 = vld [vmem:[%s186 + $0x168] sm:$0xff]
        %v294 = vld [vmem:[%s186 + $0x170] sm:$0xff]
        %v295 = vld [vmem:[%s186 + $0x178] sm:$0xff]
        %v296 = vld [vmem:[%s218] sm:$0x7]
        %v298 = vlaneseq
        %v299 = vshrl.u32 %v298, 7
        %v300 = vsub.s32 0, %v299
        %v301 = vrot.slane %v296, %v300
        %v302 = vlaneseq
        %v303 = vshrl.u32 %v302, 7
        %v304 = vsub.s32 1, %v303
        %v305 = vrot.slane %v296, %v304
        %v306 = vlaneseq
        %v307 = vshrl.u32 %v306, 7
        %v308 = vsub.s32 2, %v307
        %v309 = vrot.slane %v296, %v308
        %313 = vmatprep.subr.mxu0 %v249
        %314 = vmatpush1.msra.mxu0 %v248
        %315 = vmatprep.subr.mxu0 %v252
        %316 = vmatpush1.msra.mxu0 %v251
        %317 = vmatprep.subr.mxu0 %v255
        %318 = vmatpush1.msra.mxu0 %v254
        %319 = vmatprep.subr.mxu0 %v258
        %320 = vmatpush1.msra.mxu0 %v257
        %321 = vmatprep.subr.mxu0 %v261
        %322 = vmatpush1.msra.mxu0 %v260
        %323 = vmatprep.subr.mxu0 %v264
        %324 = vmatpush1.msra.mxu0 %v263
        %325 = vmatprep.subr.mxu0 %v267
        %326 = vmatpush1.msra.mxu0 %v266
        %327 = vmatprep.subr.mxu0 %v270
        %328 = vmatpush1.msra.mxu0 %v269
        %329 = vmatprep.subr.mxu0 %v273
        %330 = vmatpush1.msra.mxu0 %v272
        %331 = vmatprep.subr.mxu0 %v276
        %332 = vmatpush1.msra.mxu0 %v275
        %333 = vmatprep.subr.mxu0 %v279
        %334 = vmatpush1.msra.mxu0 %v278
        %335 = vmatprep.subr.mxu0 %v282
        %336 = vmatpush1.msra.mxu0 %v281
        %337 = vmatprep.subr.mxu0 %v285
        %338 = vmatpush1.msra.mxu0 %v284
        %339 = vmatprep.subr.mxu0 %v288
        %340 = vmatpush1.msra.mxu0 %v287
        %341 = vmatprep.subr.mxu0 %v291
        %342 = vmatpush1.msra.mxu0 %v290
        %343 = vmatprep.subr.mxu0 %v294
        %344 = vmatpush1.msra.mxu0 %v293
        %345 = vmatprep.subr.mxu0 0.0
        %346 = vmatpush1.msra.mxu0 0.0
        %347 = vmatprep.subr.mxu0 0.0
        %348 = vmatpush1.msra.mxu0 0.0
        %349 = vmatprep.subr.mxu0 0.0
        %350 = vmatpush1.msra.mxu0 0.0
        %351 = vmatprep.subr.mxu0 0.0
        %352 = vmatpush1.msra.mxu0 0.0
        %353 = vmatprep.subr.mxu0 0.0
        %354 = vmatpush1.msra.mxu0 0.0
        %355 = vmatprep.subr.mxu0 0.0
        %356 = vmatpush1.msra.mxu0 0.0
        %357 = vmatprep.subr.mxu0 0.0
        %358 = vmatpush1.msra.mxu0 0.0
        %359 = vmatprep.subr.mxu0 0.0
        %360 = vmatpush1.msra.mxu0 0.0
        %361 = vmatprep.subr.mxu0 0.0
        %362 = vmatpush1.msra.mxu0 0.0
        %363 = vmatprep.subr.mxu0 0.0
        %364 = vmatpush1.msra.mxu0 0.0
        %365 = vmatprep.subr.mxu0 0.0
        %366 = vmatpush1.msra.mxu0 0.0
        %367 = vmatprep.subr.mxu0 0.0
        %368 = vmatpush1.msra.mxu0 0.0
        %369 = vmatprep.subr.mxu0 0.0
        %370 = vmatpush1.msra.mxu0 0.0
        %371 = vmatprep.subr.mxu0 0.0
        %372 = vmatpush1.msra.mxu0 0.0
        %373 = vmatprep.subr.mxu0 0.0
        %374 = vmatpush1.msra.mxu0 0.0
        %375 = vmatprep.subr.mxu0 0.0
        %376 = vmatpush1.msra.mxu0 0.0
        %377 = vmatprep.mubr.f32.mxu0 0.0
        %378 = vmatmul.mubr.f32.gmra.mrb[0].mxu0 %v247
        %v379 = vpop.f32.mrb[0].mxu0
        %v380 = vadd.f32 %v301, %v379
        %v381 = vpop.f32.mrb[0].mxu0
        %v382 = vadd.f32 %v305, %v381
        %383 = vdwg.mxu0
        %384 = vmatprep.subr.mxu0 0.0
        %385 = vmatpush1.msra.mxu0 %v250
        %386 = vmatprep.subr.mxu0 0.0
        %387 = vmatpush1.msra.mxu0 %v253
        %388 = vmatprep.subr.mxu0 0.0
        %389 = vmatpush1.msra.mxu0 %v256
        %390 = vmatprep.subr.mxu0 0.0
        %391 = vmatpush1.msra.mxu0 %v259
        %392 = vmatprep.subr.mxu0 0.0
        %393 = vmatpush1.msra.mxu0 %v262
        %394 = vmatprep.subr.mxu0 0.0
        %395 = vmatpush1.msra.mxu0 %v265
        %396 = vmatprep.subr.mxu0 0.0
        %397 = vmatpush1.msra.mxu0 %v268
        %398 = vmatprep.subr.mxu0 0.0
        %399 = vmatpush1.msra.mxu0 %v271
        %400 = vmatprep.subr.mxu0 0.0
        %401 = vmatpush1.msra.mxu0 %v274
        %402 = vmatprep.subr.mxu0 0.0
        %403 = vmatpush1.msra.mxu0 %v277
        %404 = vmatprep.subr.mxu0 0.0
        %405 = vmatpush1.msra.mxu0 %v280
        %406 = vmatprep.subr.mxu0 0.0
        %407 = vmatpush1.msra.mxu0 %v283
        %408 = vmatprep.subr.mxu0 0.0
        %409 = vmatpush1.msra.mxu0 %v286
        %410 = vmatprep.subr.mxu0 0.0
        %411 = vmatpush1.msra.mxu0 %v289
        %412 = vmatprep.subr.mxu0 0.0
        %413 = vmatpush1.msra.mxu0 %v292
        %414 = vmatprep.subr.mxu0 0.0
        %415 = vmatpush1.msra.mxu0 %v295
        %416 = vmatprep.subr.mxu0 0.0
        %417 = vmatpush1.msra.mxu0 0.0
        %418 = vmatprep.subr.mxu0 0.0
        %419 = vmatpush1.msra.mxu0 0.0
        %420 = vmatprep.subr.mxu0 0.0
        %421 = vmatpush1.msra.mxu0 0.0
        %422 = vmatprep.subr.mxu0 0.0
        %423 = vmatpush1.msra.mxu0 0.0
        %424 = vmatprep.subr.mxu0 0.0
        %425 = vmatpush1.msra.mxu0 0.0
        %426 = vmatprep.subr.mxu0 0.0
        %427 = vmatpush1.msra.mxu0 0.0
        %428 = vmatprep.subr.mxu0 0.0
        %429 = vmatpush1.msra.mxu0 0.0
        %430 = vmatprep.subr.mxu0 0.0
        %431 = vmatpush1.msra.mxu0 0.0
        %432 = vmatprep.subr.mxu0 0.0
        %433 = vmatpush1.msra.mxu0 0.0
        %434 = vmatprep.subr.mxu0 0.0
        %435 = vmatpush1.msra.mxu0 0.0
        %436 = vmatprep.subr.mxu0 0.0
        %437 = vmatpush1.msra.mxu0 0.0
        %438 = vmatprep.subr.mxu0 0.0
        %439 = vmatpush1.msra.mxu0 0.0
        %440 = vmatprep.subr.mxu0 0.0
        %441 = vmatpush1.msra.mxu0 0.0
        %442 = vmatprep.subr.mxu0 0.0
        %443 = vmatpush1.msra.mxu0 0.0
        %444 = vmatprep.subr.mxu0 0.0
        %445 = vmatpush1.msra.mxu0 0.0
        %446 = vmatprep.subr.mxu0 0.0
        %447 = vmatpush1.msra.mxu0 0.0
        %448 = vmatprep.mubr.f32.mxu0 0.0
        %449 = vmatmul.mubr.f32.gmra.mrb[0].mxu0 %v247
        %v450 = vpop.f32.mrb[0].mxu0
        %v451 = vadd.f32 %v309, %v450
        %v452 = vpop.f32.mrb[0].mxu0
        %453 = vdwg.mxu0
        %v454 = vxor.u32 %v380, 2147483648
        %v455 = vmul.f32 %v454, 1.442695
        %v456 = vpow.pop %v455
        %v457 = vadd.f32 %v456, 1.0
        %v458 = vrcp.pop %v457
        %v459 = vmul.f32 1.0, %v458
        %v460 = vxor.u32 %v382, 2147483648
        %v461 = vmul.f32 %v460, 1.442695
        %v462 = vpow.pop %v461
        %v463 = vadd.f32 %v462, 1.0
        %v464 = vrcp.pop %v463
        %v465 = vmul.f32 1.0, %v464
        %v466 = vld [vmem:[%s221] sm:$0x1]
        %v467 = vmul.f32 %v459, %v466
        %v468 = vadd.f32 %v451, %v467
        %v469 = vtanh.pop %v468
        %v470 = vsub.f32 1.0, %v465
        %v471 = vmul.f32 %v470, %v469
        %472 = vst [vmem:[#allocation2] sm:$0x1] %v471
        %473 = vst [vmem:[%s214] sm:$0x1] %v471
        %s474 = sand.u32 %s109, 1
        %s475 = scalar_lea.sflag [#allocation8], %s474
        %s476 = sand.u32 %s109, 1
        %s477 = scalar_lea.vmem [#allocation9], %s476
        // Predicated region
        $region45: #{tpu_custom_call.1} parent=31 // pred_check
          %p478 = pneg %p119
        $region46: #{tpu_custom_call.1} parent=31 // pred_check_branch
          %480 = sbr.rel (%p478) target = $region48
        $region47: #{tpu_custom_call.1} parent=31 // pred_region
          %s482 = ssub.s32 16, 16
          %483 = vsyncadd %s475, %s482
          %s484 = smul.addr %s23, 16
          %s485 = scalar_lea.hbm %s5, %s484
          %s487 = sshll.u32 %s477, 4
          %s488 = int_to_ptr.vmem [resolvable:$true] %s487
          %490 = dma.vmem_to_hbm [thread:$0]  %s488, 16, %s485, %s475
        $region48: #{tpu_custom_call.1} parent=31 // pred_fallthru
          _
      $region32: #{tpu_custom_call.1} parent=5 // pred_fallthru
        _
      %p491 = scmp.le.s32.totalorder 2, %s18
      // Predicated region
      $region49: #{tpu_custom_call.1} parent=5 // pred_check
        %p492 = pneg %p491
      $region50: #{tpu_custom_call.1} parent=5 // pred_check_branch
        %494 = sbr.rel (%p492) target = $region52
      $region51: #{tpu_custom_call.1} parent=5 // pred_region
        %s495 = ssub.s32 %s18, 2
        // Predicated region
        $region53: #{tpu_custom_call.1} parent=51 // pred_check
          %p496 = pneg %p125
        $region54: #{tpu_custom_call.1} parent=51 // pred_check_branch
          %498 = sbr.rel (%p496) target = $region56
        $region55: #{tpu_custom_call.1} parent=51 // pred_region
          %s499 = sand.u32 %s110, 1
          %s500 = scalar_lea.sflag [#allocation8], %s499
          %s501 = sand.u32 %s110, 1
          %s502 = scalar_lea.vmem [#allocation9], %s501
          %503 = dma.done %s500, 16
        $region56: #{tpu_custom_call.1} parent=51 // pred_fallthru
          _
      $region52: #{tpu_custom_call.1} parent=5 // pred_fallthru
        _
    $region6: #{tpu_custom_call.1} parent=1 // loop_footer
      %s22 = sadd.s32 1, %s18
    $region7: #{tpu_custom_call.1} parent=1 // loop_footer_branch
      %17 = sbr.rel target = $region3
    $region8: #{tpu_custom_call.1} parent=1 // loop_exit
      _
    %504 = vsyncpa [#allocation7], 1
    %s505 = scalar_lea.sflag [#allocation7], 1
    %506 = vsyncpa %s505, 1
    %507 = vsyncpa [#allocation8], 1
    %s508 = scalar_lea.sflag [#allocation8], 1
    %509 = vsyncpa %s508, 1
  %510 = vsyncmov [#allocation3]
  %s511 = vpop.sfrf %510
  %p512 = scmp.eq.s32.totalorder %s511, 0
  %p513 = pneg %p512
  %515 = shalt.err (%p513)

</llo_original>
